<compile_context>
chip_gen: v7x
topology: tpu7x:2x2x1
jax: 0.10.0
libtpu: 0.0.40
codegen_flags: <defaults>
</compile_context>

<pallas_src>
import jax
import jax.numpy as jnp
from jax import lax
from jax.experimental import pallas as pl
from jax.experimental.pallas import tpu as pltpu


def _round_up(v, m):
    return (v + m - 1) // m * m


def _default_tile_m(n):
    # Biggest row tile whose double-buffered bf16 A_hat slab stays modest
    # (safe on v7x's 64 MiB VMEM); clamp to [16, 512] and to the (padded) node count.
    t = (2 * 1024 * 1024) // max(n, 1)
    t = max(16, min(512, t, _round_up(n, 16)))
    return (t // 16) * 16


def _gcn2_kernel(a_ref, x_ref, w1_ref, b1_ref, w2_ref, b2_ref,
                 out_ref, xw_ref, x1_ref):
    """Fused 2-layer GCN over grid (layer, node_row_tile).

    a_ref  : [tm, Np]   bf16  row tile of A_hat = D^-1/2 (A+I) D^-1/2
    x_ref  : [Np, Cin]  bf16  node features (full, resident)
    w1_ref : [Cin, Cp]  bf16  layer-1 weight (lane-padded to Cp)
    b1_ref : [1, Cp]    f32   layer-1 bias
    w2_ref : [Cp, Cp]   bf16  layer-2 weight (lane-padded)
    b2_ref : [1, Cp]    f32   layer-2 bias
    out_ref: [tm, Cp]   f32   final node embeddings (row tile)
    xw_ref : [Np, Cp]   bf16  scratch: per-layer dense projection X @ W_l
    x1_ref : [Np, Cp]   f32   scratch: layer-1 activations (resident across the grid)
    """
    layer = pl.program_id(0)
    i = pl.program_id(1)
    tm = a_ref.shape[0]

    # --- Stage the per-layer dense projection once per layer (first row tile). ---
    @pl.when((layer == 0) & (i == 0))
    def _():
        xw_ref[...] = jnp.dot(
            x_ref[...], w1_ref[...],
            preferred_element_type=jnp.float32).astype(xw_ref.dtype)

    @pl.when((layer == 1) & (i == 0))
    def _():
        # Layer-1 activations are complete here: all (layer==0, i) grid steps
        # have already run (grid iterates the layer axis outermost, sequentially).
        xw_ref[...] = jnp.dot(
            x1_ref[...].astype(w2_ref.dtype), w2_ref[...],
            preferred_element_type=jnp.float32).astype(xw_ref.dtype)

    # --- Aggregate this row tile: rows [i*tm, (i+1)*tm) of A_hat @ (X W_l). ---
    agg = jnp.dot(a_ref[...], xw_ref[...], preferred_element_type=jnp.float32)

    @pl.when(layer == 0)
    def _():
        h = jnp.maximum(agg + b1_ref[...], 0.0)                 # ReLU
        # TODO(synk): dropout(p=0.2) between layers is training-only; eval => identity.
        row = pl.multiple_of(i * tm, tm)
        x1_ref[pl.ds(row, tm), :] = h                           # keep resident in VMEM
        out_ref[...] = h        # deterministic placeholder; overwritten by layer 2

    @pl.when(layer == 1)
    def _():
        out_ref[...] = agg + b2_ref[...]


def _gcn_norm_adj(edge_index, num_nodes):
    """Dense D^{-1/2} (A + I) D^{-1/2} with PyG gcn_norm conventions
    (aggregation target on rows, source on columns)."""
    src = edge_index[0]
    dst = edge_index[1]
    a = jnp.zeros((num_nodes, num_nodes), jnp.float32)
    a = a.at[dst, src].add(1.0)                                 # A[target, source]
    a = a + jnp.eye(num_nodes, dtype=jnp.float32)               # add_self_loops=True
    deg = jnp.sum(a, axis=1)                                    # in-degree incl. self loop
    dinv = jnp.where(deg > 0.0, lax.rsqrt(deg), 0.0)
    return a * dinv[:, None] * dinv[None, :]


def graph_encoder_forward(x, edge_index, num_nodes, params, *, tile_m=None):
    """Mirrors GraphEncoder.forward in eval mode: conv1 -> relu -> (dropout) -> conv2."""
    w1, b1, w2, b2 = params["w1"], params["b1"], params["w2"], params["b2"]
    in_ch, hid = w1.shape
    out_ch = w2.shape[1]

    # Lane-pad channel dims to a multiple of 128 (dense, unmasked vector stores).
    c_pad = max(_round_up(hid, 128), _round_up(out_ch, 128))

    # Glue (once per graph): normalized dense adjacency; degrees never computed in-kernel.
    # TODO(synk): for large sparse graphs keep the COO edge_index in SMEM via scalar
    # prefetch and gather per-edge, instead of materializing the dense [N, N] adjacency.
    a_norm = _gcn_norm_adj(edge_index, num_nodes)

    n = num_nodes
    if tile_m is None:
        tile_m = _default_tile_m(n)
    n_pad = _round_up(n, tile_m)
    nt = n_pad // tile_m

    # Zero-pad everything (zero rows/cols are inert under the aggregation).
    a_p = jnp.zeros((n_pad, n_pad), jnp.bfloat16).at[:n, :n].set(
        a_norm.astype(jnp.bfloat16))
    x_p = jnp.zeros((n_pad, in_ch), jnp.bfloat16).at[:n, :].set(
        x.astype(jnp.bfloat16))
    w1_p = jnp.zeros((in_ch, c_pad), jnp.bfloat16).at[:, :hid].set(
        w1.astype(jnp.bfloat16))
    b1_p = jnp.zeros((1, c_pad), jnp.float32).at[0, :hid].set(b1)
    w2_p = jnp.zeros((c_pad, c_pad), jnp.bfloat16).at[:hid, :out_ch].set(
        w2.astype(jnp.bfloat16))
    b2_p = jnp.zeros((1, c_pad), jnp.float32).at[0, :out_ch].set(b2)

    out = pl.pallas_call(
        _gcn2_kernel,
        out_shape=jax.ShapeDtypeStruct((n_pad, c_pad), jnp.float32),
        grid_spec=pltpu.PrefetchScalarGridSpec(
            num_scalar_prefetch=0,
            grid=(2, nt),                                          # (layer, node row tile)
            in_specs=[
                pl.BlockSpec((tile_m, n_pad), lambda l, i: (i, 0)),  # A_hat row tile
                pl.BlockSpec((n_pad, in_ch), lambda l, i: (0, 0)),   # X (resident)
                pl.BlockSpec((in_ch, c_pad), lambda l, i: (0, 0)),   # W1
                pl.BlockSpec((1, c_pad), lambda l, i: (0, 0)),       # b1
                pl.BlockSpec((c_pad, c_pad), lambda l, i: (0, 0)),   # W2
                pl.BlockSpec((1, c_pad), lambda l, i: (0, 0)),       # b2
            ],
            out_specs=pl.BlockSpec((tile_m, c_pad), lambda l, i: (i, 0)),
            scratch_shapes=[
                pltpu.VMEM((n_pad, c_pad), jnp.bfloat16),   # X @ W_l projection
                pltpu.VMEM((n_pad, c_pad), jnp.float32),    # layer-1 activations
            ],
        ),
        compiler_params=pltpu.CompilerParams(
            # Both axes are sequential: layer 2 consumes the resident layer-1
            # activations, and X W_l is staged at the first row tile of each layer.
            dimension_semantics=("arbitrary", "arbitrary"),
            vmem_limit_bytes=48 * 1024 * 1024,   # explicit; leaves headroom on v7x's 64 MiB
        ),
    )(a_p, x_p, w1_p, b1_p, w2_p, b2_p)

    return out[:n, :out_ch]


def init_params(key, in_channels, out_channels):
    hid = 2 * out_channels
    k1, k2 = jax.random.split(key)
    # Glorot-style weight init; zero biases (matches PyG GCNConv bias init).
    w1 = jax.random.normal(k1, (in_channels, hid), jnp.float32) * (in_channels ** -0.5)
    b1 = jnp.zeros((hid,), jnp.float32)
    w2 = jax.random.normal(k2, (hid, out_channels), jnp.float32) * (hid ** -0.5)
    b2 = jnp.zeros((out_channels,), jnp.float32)
    return {"w1": w1, "b1": b1, "w2": w2, "b2": b2}


if __name__ == "__main__":
    in_channels, out_channels = 4, 32
    num_nodes, num_edges = 32, 96

    key = jax.random.PRNGKey(0)
    key, kx, ks, kd, kp = jax.random.split(key, 5)
    x = jax.random.normal(kx, (num_nodes, in_channels), jnp.float32)
    src = jax.random.randint(ks, (num_edges,), 0, num_nodes)
    dst = jax.random.randint(kd, (num_edges,), 0, num_nodes)
    edge_index = jnp.stack([src, dst], axis=0)          # [2, E] COO (PyG convention)

    params = init_params(kp, in_channels, out_channels)

    out = graph_encoder_forward(x, edge_index, num_nodes, params, tile_m=16)
    jax.block_until_ready(out)

    assert out.shape == (num_nodes, out_channels)
    assert bool(jnp.all(jnp.isfinite(out)))
    print("KERNEL_OK")
</pallas_src>

<mosaic_0001>
module attributes {stable_mosaic.version = 11 : i64} {
  func.func @_gcn2_kernel(%arg0: i32, %arg1: i32, %arg2: memref<16x32xbf16, #tpu.memory_space<vmem>>, %arg3: memref<32x4xbf16, #tpu.memory_space<vmem>>, %arg4: memref<4x128xbf16, #tpu.memory_space<vmem>>, %arg5: memref<1x128xf32, #tpu.memory_space<vmem>>, %arg6: memref<128x128xbf16, #tpu.memory_space<vmem>>, %arg7: memref<1x128xf32, #tpu.memory_space<vmem>>, %arg8: memref<16x128xf32, #tpu.memory_space<vmem>>, %arg9: memref<32x128xbf16, #tpu.memory_space<vmem>>, %arg10: memref<32x128xf32, #tpu.memory_space<vmem>>) attributes {dimension_semantics = [#tpu.dimension_semantics<arbitrary>, #tpu.dimension_semantics<arbitrary>], iteration_bounds = array<i64: 2, 2>, scalar_prefetch = 0 : i64, scratch_operands = 2 : i64, tpu.core_type = #tpu.core_type<tc>, window_params = [{transform_indices = @transform_0, window_bounds = array<i64: 16, 32>}, {pipeline_mode = #tpu.pipeline_mode<synchronous>, transform_indices = @transform_1, window_bounds = array<i64: 32, 4>}, {pipeline_mode = #tpu.pipeline_mode<synchronous>, transform_indices = @transform_2, window_bounds = array<i64: 4, 128>}, {pipeline_mode = #tpu.pipeline_mode<synchronous>, transform_indices = @transform_3, window_bounds = array<i64: 1, 128>}, {pipeline_mode = #tpu.pipeline_mode<synchronous>, transform_indices = @transform_4, window_bounds = array<i64: 128, 128>}, {pipeline_mode = #tpu.pipeline_mode<synchronous>, transform_indices = @transform_5, window_bounds = array<i64: 1, 128>}, {transform_indices = @transform_6, window_bounds = array<i64: 16, 128>}]} {
    %c0_i32 = arith.constant 0 : i32
    %0 = arith.cmpi eq, %arg0, %c0_i32 : i32
    %c0_i32_0 = arith.constant 0 : i32
    %1 = arith.cmpi eq, %arg1, %c0_i32_0 : i32
    %2 = arith.andi %0, %1 : i1
    %3 = arith.extui %2 : i1 to i32
    %c0_i32_1 = arith.constant 0 : i32
    %4 = arith.cmpi ne, %3, %c0_i32_1 : i32
    scf.if %4 {
      %c0_11 = arith.constant 0 : index
      %c0_12 = arith.constant 0 : index
      %19 = vector.load %arg3[%c0_11, %c0_12] : memref<32x4xbf16, #tpu.memory_space<vmem>>, vector<32x4xbf16>
      %c0_13 = arith.constant 0 : index
      %c0_14 = arith.constant 0 : index
      %20 = vector.load %arg4[%c0_13, %c0_14] : memref<4x128xbf16, #tpu.memory_space<vmem>>, vector<4x128xbf16>
      %cst_15 = arith.constant dense<0.000000e+00> : vector<32x128xf32>
      %21 = tpu.matmul %19, %20, %cst_15 {dimension_numbers = #tpu.dot_dimension_numbers<[1], [0], [0], [1], [0, 0, 1, 1], [], []>} : vector<32x4xbf16>, vector<4x128xbf16>, vector<32x128xf32> -> vector<32x128xf32>
      %22 = arith.truncf %21 : vector<32x128xf32> to vector<32x128xbf16>
      %c0_16 = arith.constant 0 : index
      %c0_17 = arith.constant 0 : index
      %23 = vector.load %arg9[%c0_16, %c0_17] : memref<32x128xbf16, #tpu.memory_space<vmem>>, vector<32x128xbf16>
      tpu.vector_store %arg9[%c0_16, %c0_17], %22 {strides = array<i32>} : memref<32x128xbf16, #tpu.memory_space<vmem>>, vector<32x128xbf16>,
    } else {
    }
    %c1_i32 = arith.constant 1 : i32
    %5 = arith.cmpi eq, %arg0, %c1_i32 : i32
    %c0_i32_2 = arith.constant 0 : i32
    %6 = arith.cmpi eq, %arg1, %c0_i32_2 : i32
    %7 = arith.andi %5, %6 : i1
    %8 = arith.extui %7 : i1 to i32
    %c0_i32_3 = arith.constant 0 : i32
    %9 = arith.cmpi ne, %8, %c0_i32_3 : i32
    scf.if %9 {
      %c0_11 = arith.constant 0 : index
      %c0_12 = arith.constant 0 : index
      %19 = vector.load %arg10[%c0_11, %c0_12] : memref<32x128xf32, #tpu.memory_space<vmem>>, vector<32x128xf32>
      %20 = arith.truncf %19 : vector<32x128xf32> to vector<32x128xbf16>
      %c0_13 = arith.constant 0 : index
      %c0_14 = arith.constant 0 : index
      %21 = vector.load %arg6[%c0_13, %c0_14] : memref<128x128xbf16, #tpu.memory_space<vmem>>, vector<128x128xbf16>
      %cst_15 = arith.constant dense<0.000000e+00> : vector<32x128xf32>
      %22 = tpu.matmul %20, %21, %cst_15 {dimension_numbers = #tpu.dot_dimension_numbers<[1], [0], [0], [1], [0, 0, 1, 1], [], []>} : vector<32x128xbf16>, vector<128x128xbf16>, vector<32x128xf32> -> vector<32x128xf32>
      %23 = arith.truncf %22 : vector<32x128xf32> to vector<32x128xbf16>
      %c0_16 = arith.constant 0 : index
      %c0_17 = arith.constant 0 : index
      %24 = vector.load %arg9[%c0_16, %c0_17] : memref<32x128xbf16, #tpu.memory_space<vmem>>, vector<32x128xbf16>
      tpu.vector_store %arg9[%c0_16, %c0_17], %23 {strides = array<i32>} : memref<32x128xbf16, #tpu.memory_space<vmem>>, vector<32x128xbf16>,
    } else {
    }
    %c0 = arith.constant 0 : index
    %c0_4 = arith.constant 0 : index
    %10 = vector.load %arg2[%c0, %c0_4] : memref<16x32xbf16, #tpu.memory_space<vmem>>, vector<16x32xbf16>
    %c0_5 = arith.constant 0 : index
    %c0_6 = arith.constant 0 : index
    %11 = vector.load %arg9[%c0_5, %c0_6] : memref<32x128xbf16, #tpu.memory_space<vmem>>, vector<32x128xbf16>
    %cst = arith.constant dense<0.000000e+00> : vector<16x128xf32>
    %12 = tpu.matmul %10, %11, %cst {dimension_numbers = #tpu.dot_dimension_numbers<[1], [0], [0], [1], [0, 0, 1, 1], [], []>} : vector<16x32xbf16>, vector<32x128xbf16>, vector<16x128xf32> -> vector<16x128xf32>
    %c0_i32_7 = arith.constant 0 : i32
    %13 = arith.cmpi eq, %arg0, %c0_i32_7 : i32
    %14 = arith.extui %13 : i1 to i32
    %c0_i32_8 = arith.constant 0 : i32
    %15 = arith.cmpi ne, %14, %c0_i32_8 : i32
    scf.if %15 {
      %c0_11 = arith.constant 0 : index
      %c0_12 = arith.constant 0 : index
      %19 = vector.load %arg5[%c0_11, %c0_12] : memref<1x128xf32, #tpu.memory_space<vmem>>, vector<1x128xf32>
      %20 = vector.broadcast %19 : vector<1x128xf32> to vector<16x128xf32>
      %21 = arith.addf %12, %20 : vector<16x128xf32>
      %cst_13 = arith.constant 0.000000e+00 : f32
      %22 = vector.broadcast %cst_13 : f32 to vector<16x128xf32>
      %23 = arith.maximumf %21, %22 : vector<16x128xf32>
      %c16_i32 = arith.constant 16 : i32
      %24 = arith.muli %arg1, %c16_i32 : i32
      %25 = tpu.assume_multiple %24, 16 : i32
      %26 = arith.index_cast %25 : i32 to index
      %c0_14 = arith.constant 0 : index
      %27 = vector.load %arg10[%26, %c0_14] : memref<32x128xf32, #tpu.memory_space<vmem>>, vector<16x128xf32>
      tpu.vector_store %arg10[%26, %c0_14], %23 {strides = array<i32>} : memref<32x128xf32, #tpu.memory_space<vmem>>, vector<16x128xf32>,
      %c0_15 = arith.constant 0 : index
      %c0_16 = arith.constant 0 : index
      %28 = vector.load %arg8[%c0_15, %c0_16] : memref<16x128xf32, #tpu.memory_space<vmem>>, vector<16x128xf32>
      tpu.vector_store %arg8[%c0_15, %c0_16], %23 {strides = array<i32>} : memref<16x128xf32, #tpu.memory_space<vmem>>, vector<16x128xf32>,
    } else {
    }
    %c1_i32_9 = arith.constant 1 : i32
    %16 = arith.cmpi eq, %arg0, %c1_i32_9 : i32
    %17 = arith.extui %16 : i1 to i32
    %c0_i32_10 = arith.constant 0 : i32
    %18 = arith.cmpi ne, %17, %c0_i32_10 : i32
    scf.if %18 {
      %c0_11 = arith.constant 0 : index
      %c0_12 = arith.constant 0 : index
      %19 = vector.load %arg7[%c0_11, %c0_12] : memref<1x128xf32, #tpu.memory_space<vmem>>, vector<1x128xf32>
      %20 = vector.broadcast %19 : vector<1x128xf32> to vector<16x128xf32>
      %21 = arith.addf %12, %20 : vector<16x128xf32>
      %c0_13 = arith.constant 0 : index
      %c0_14 = arith.constant 0 : index
      %22 = vector.load %arg8[%c0_13, %c0_14] : memref<16x128xf32, #tpu.memory_space<vmem>>, vector<16x128xf32>
      tpu.vector_store %arg8[%c0_13, %c0_14], %21 {strides = array<i32>} : memref<16x128xf32, #tpu.memory_space<vmem>>, vector<16x128xf32>,
    } else {
    }
    return
  }
  func.func @transform_0(%arg0: i32, %arg1: i32) -> (i32, i32) {
    %c0_i32 = arith.constant 0 : i32
    %c0_i32_0 = arith.constant 0 : i32
    return %arg1, %c0_i32 : i32, i32
  }
  func.func @transform_1(%arg0: i32, %arg1: i32) -> (i32, i32) {
    %c0_i32 = arith.constant 0 : i32
    %c0_i32_0 = arith.constant 0 : i32
    %c0_i32_1 = arith.constant 0 : i32
    return %c0_i32, %c0_i32_0 : i32, i32
  }
  func.func @transform_2(%arg0: i32, %arg1: i32) -> (i32, i32) {
    %c0_i32 = arith.constant 0 : i32
    %c0_i32_0 = arith.constant 0 : i32
    %c0_i32_1 = arith.constant 0 : i32
    return %c0_i32, %c0_i32_0 : i32, i32
  }
  func.func @transform_3(%arg0: i32, %arg1: i32) -> (i32, i32) {
    %c0_i32 = arith.constant 0 : i32
    %c0_i32_0 = arith.constant 0 : i32
    %c0_i32_1 = arith.constant 0 : i32
    return %c0_i32, %c0_i32_0 : i32, i32
  }
  func.func @transform_4(%arg0: i32, %arg1: i32) -> (i32, i32) {
    %c0_i32 = arith.constant 0 : i32
    %c0_i32_0 = arith.constant 0 : i32
    %c0_i32_1 = arith.constant 0 : i32
    return %c0_i32, %c0_i32_0 : i32, i32
  }
  func.func @transform_5(%arg0: i32, %arg1: i32) -> (i32, i32) {
    %c0_i32 = arith.constant 0 : i32
    %c0_i32_0 = arith.constant 0 : i32
    %c0_i32_1 = arith.constant 0 : i32
    return %c0_i32, %c0_i32_0 : i32, i32
  }
  func.func @transform_6(%arg0: i32, %arg1: i32) -> (i32, i32) {
    %c0_i32 = arith.constant 0 : i32
    %c0_i32_0 = arith.constant 0 : i32
    return %arg1, %c0_i32 : i32, i32
  }
}

</mosaic_0001>

<llo_original>
// kernel: tpu_custom_call.1
$region0: #{tpu_custom_call.1}
  #allocation0 [shape = 'u32[]', space=smem, size = 0x4, offset = 0x4, fixed_abs, tag = 'smem constant byte address 0x4 - core index']
  #allocation1 [shape = 'u32[144,128]{1,0:T(1,128)}', space=vmem, size = 0x12000, scoped, tag = 'internal scratch']
  #allocation2 [shape = 'bf16[32,128]{1,0:T(16,128)(2,1)}', space=vmem, size = 0x2000, scoped, tag = 'scratch operand']
  #allocation3 [shape = 'f32[32,128]{1,0:T(8,128)}', space=vmem, size = 0x4000, scoped, tag = 'scratch operand']
  %s0 = inlined_call_operand.vmem [shape: bf16[32,32], index: 0, kind: input, shape index: {}]
  %s1 = inlined_call_operand.vmem [shape: bf16[32,4], index: 1, kind: input, shape index: {}]
  %s2 = inlined_call_operand.vmem [shape: bf16[4,128], index: 2, kind: input, shape index: {}]
  %s3 = inlined_call_operand.vmem [shape: f32[1,128], index: 3, kind: input, shape index: {}]
  %s4 = inlined_call_operand.hbm [shape: bf16[128,128], index: 4, kind: input, shape index: {}]
  %s5 = inlined_call_operand.vmem [shape: f32[1,128], index: 5, kind: input, shape index: {}]
  %s6 = inlined_call_operand.hbm [shape: f32[32,128], index: 6, kind: output, shape index: {}]
  %s7 = sld [smem:[#allocation0]]
  $region77: #{tpu_custom_call.1} parent=0
    _
  %s9 = ssub.s32 1, %s7
  %s10 = scalar_select 0, %s9, %s7
  $region1: #{tpu_custom_call.1} parent=0
    #allocation4 [shape = 'u8[32768]{0}', space=vmem, size = 0x8000, scoped, tag = 'input window, operand 4, single buffered']
    #allocation5 [shape = 's32[2]{0}', space=sflag, size = 0x8, scoped, tag = 'scoped memory for tpu_custom_call.1']
    #allocation6 [shape = 's32[2]{0}', space=sflag, size = 0x8, scoped, tag = 'scoped memory for tpu_custom_call.1']
    #allocation7 [shape = 'u8[16384]{0}', space=vmem, size = 0x4000, scoped, tag = 'output window, operand 0']
    %11 = vsyncpa [#allocation5], 0
    %12 = vsyncpa [#allocation6], 0
    %s13 = scalar_lea.sflag [#allocation6], 1
    %14 = vsyncpa %s13, 0
    loop: start=0, step=1, limit=6
    $region2: #{tpu_custom_call.1} parent=1 // loop_pre_header
      _
    $region3: #{tpu_custom_call.1} parent=1 // loop_header
      %s16 = sphi 0, %s20
      %p17 = scmp.ge.s32.totalorder %s16, 6
      %s23 = sphi 0, %s35
      %s24 = sphi 0, %s31
      %s25 = sphi 0, %s23
      %s26 = sphi 0, %s24
      %s27 = sphi 0, %s25
      %s28 = sphi 0, %s26
      %s38 = sphi 0, %s40
      %s41 = sphi 0, %s38
      %s42 = sphi 0, %s41
      %s58 = sphi 0, %s42
      %s62 = sphi 0, %s62
      %s64 = sphi 0, %s62
      %s65 = sphi 0, %s64
      %s79 = sphi 0, %s65
      %s83 = sphi 0, %s83
      %s85 = sphi 0, %s83
      %s86 = sphi 0, %s85
      %s100 = sphi 0, %s86
      %s104 = sphi 0, %s104
      %s106 = sphi 0, %s104
      %s107 = sphi 0, %s106
      %s121 = sphi 0, %s107
      %s125 = sphi 0, %s125
      %s127 = sphi 0, %s125
      %s128 = sphi 0, %s127
      %s142 = sphi 0, %s128
      %s146 = sphi 0, %s146
      %s148 = sphi 0, %s146
      %s149 = sphi 0, %s148
      %s163 = sphi 0, %s149
      %s169 = sphi 0, %s171
      %s172 = sphi 0, %s169
      %s173 = sphi 0, %s172
      %s189 = sphi 0, %s173
    $region4: #{tpu_custom_call.1} parent=1 // loop_header_branch
      %19 = sbr.rel (%p17) target = $region8
    $region5: #{tpu_custom_call.1} parent=1 // loop_body
      %s21 = ssub.s32 %s16, 1
      %s22 = ssub.s32 %s16, 2
      %s29 = sadd.s32 1, %s24
      %p30 = scmp.ge.s32.totalorder %s29, 2
      %s31 = scalar_select %p30, 0, %s29
      %s32 = sadd.s32 1, %s23
      %s33 = scalar_select %p30, %s32, %s23
      %p34 = scmp.ge.s32.totalorder %s33, 2
      %s35 = scalar_select %p34, 0, %s33
      %s36 = ssub.s32 %s24, %s31
      %p37 = scmp.eq.s32.totalorder %s36, 0
      %s39 = sadd.s32 %s38, 1
      %s40 = scalar_select %p37, %s38, %s39
      %p43 = pneg %p37
      %p44 = scmp.eq.s32.totalorder %s16, 3
      %p45 = por %p43, %p44
      %p46 = scmp.ne.s32.totalorder %s38, %s41
      %p47 = scmp.eq.s32.totalorder %s16, 0
      %p48 = por %p46, %p47
      %p49 = scmp.ne.s32.totalorder %s38, %s41
      %p50 = scmp.eq.s32.totalorder %s21, 3
      %p51 = por %p49, %p50
      %p52 = scmp.ne.s32.totalorder %s41, %s42
      %p53 = scmp.eq.s32.totalorder %s21, 0
      %p54 = por %p52, %p53
      %p55 = scmp.ne.s32.totalorder %s41, %s42
      %p56 = scmp.eq.s32.totalorder %s22, 3
      %p57 = por %p55, %p56
      %p59 = scmp.ne.s32.totalorder %s42, %s58
      %p60 = scmp.eq.s32.totalorder %s22, 0
      %p61 = por %p59, %p60
      %s63 = sadd.s32 %s62, 1
      %p66 = scmp.eq.s32.totalorder %s16, 3
      %p67 = scmp.ne.s32.totalorder %s62, %s64
      %p68 = scmp.eq.s32.totalorder %s16, 0
      %p69 = por %p67, %p68
      %p70 = scmp.ne.s32.totalorder %s62, %s64
      %p71 = scmp.eq.s32.totalorder %s21, 3
      %p72 = por %p70, %p71
      %p73 = scmp.ne.s32.totalorder %s64, %s65
      %p74 = scmp.eq.s32.totalorder %s21, 0
      %p75 = por %p73, %p74
      %p76 = scmp.ne.s32.totalorder %s64, %s65
      %p77 = scmp.eq.s32.totalorder %s22, 3
      %p78 = por %p76, %p77
      %p80 = scmp.ne.s32.totalorder %s65, %s79
      %p81 = scmp.eq.s32.totalorder %s22, 0
      %p82 = por %p80, %p81
      %s84 = sadd.s32 %s83, 1
      %p87 = scmp.eq.s32.totalorder %s16, 3
      %p88 = scmp.ne.s32.totalorder %s83, %s85
      %p89 = scmp.eq.s32.totalorder %s16, 0
      %p90 = por %p88, %p89
      %p91 = scmp.ne.s32.totalorder %s83, %s85
      %p92 = scmp.eq.s32.totalorder %s21, 3
      %p93 = por %p91, %p92
      %p94 = scmp.ne.s32.totalorder %s85, %s86
      %p95 = scmp.eq.s32.totalorder %s21, 0
      %p96 = por %p94, %p95
      %p97 = scmp.ne.s32.totalorder %s85, %s86
      %p98 = scmp.eq.s32.totalorder %s22, 3
      %p99 = por %p97, %p98
      %p101 = scmp.ne.s32.totalorder %s86, %s100
      %p102 = scmp.eq.s32.totalorder %s22, 0
      %p103 = por %p101, %p102
      %s105 = sadd.s32 %s104, 1
      %p108 = scmp.eq.s32.totalorder %s16, 3
      %p109 = scmp.ne.s32.totalorder %s104, %s106
      %p110 = scmp.eq.s32.totalorder %s16, 0
      %p111 = por %p109, %p110
      %p112 = scmp.ne.s32.totalorder %s104, %s106
      %p113 = scmp.eq.s32.totalorder %s21, 3
      %p114 = por %p112, %p113
      %p115 = scmp.ne.s32.totalorder %s106, %s107
      %p116 = scmp.eq.s32.totalorder %s21, 0
      %p117 = por %p115, %p116
      %p118 = scmp.ne.s32.totalorder %s106, %s107
      %p119 = scmp.eq.s32.totalorder %s22, 3
      %p120 = por %p118, %p119
      %p122 = scmp.ne.s32.totalorder %s107, %s121
      %p123 = scmp.eq.s32.totalorder %s22, 0
      %p124 = por %p122, %p123
      %s126 = sadd.s32 %s125, 1
      %p129 = scmp.eq.s32.totalorder %s16, 3
      %p130 = scmp.ne.s32.totalorder %s125, %s127
      %p131 = scmp.eq.s32.totalorder %s16, 0
      %p132 = por %p130, %p131
      %p133 = scmp.ne.s32.totalorder %s125, %s127
      %p134 = scmp.eq.s32.totalorder %s21, 3
      %p135 = por %p133, %p134
      %p136 = scmp.ne.s32.totalorder %s127, %s128
      %p137 = scmp.eq.s32.totalorder %s21, 0
      %p138 = por %p136, %p137
      %p139 = scmp.ne.s32.totalorder %s127, %s128
      %p140 = scmp.eq.s32.totalorder %s22, 3
      %p141 = por %p139, %p140
      %p143 = scmp.ne.s32.totalorder %s128, %s142
      %p144 = scmp.eq.s32.totalorder %s22, 0
      %p145 = por %p143, %p144
      %s147 = sadd.s32 %s146, 1
      %p150 = scmp.eq.s32.totalorder %s16, 3
      %p151 = scmp.ne.s32.totalorder %s146, %s148
      %p152 = scmp.eq.s32.totalorder %s16, 0
      %p153 = por %p151, %p152
      %p154 = scmp.ne.s32.totalorder %s146, %s148
      %p155 = scmp.eq.s32.totalorder %s21, 3
      %p156 = por %p154, %p155
      %p157 = scmp.ne.s32.totalorder %s148, %s149
      %p158 = scmp.eq.s32.totalorder %s21, 0
      %p159 = por %p157, %p158
      %p160 = scmp.ne.s32.totalorder %s148, %s149
      %p161 = scmp.eq.s32.totalorder %s22, 3
      %p162 = por %p160, %p161
      %p164 = scmp.ne.s32.totalorder %s149, %s163
      %p165 = scmp.eq.s32.totalorder %s22, 0
      %p166 = por %p164, %p165
      %s167 = ssub.s32 %s24, %s31
      %p168 = scmp.eq.s32.totalorder %s167, 0
      %s170 = sadd.s32 %s169, 1
      %s171 = scalar_select %p168, %s169, %s170
      %p174 = pneg %p168
      %p175 = scmp.eq.s32.totalorder %s16, 3
      %p176 = por %p174, %p175
      %p177 = scmp.ne.s32.totalorder %s169, %s172
      %p178 = scmp.eq.s32.totalorder %s16, 0
      %p179 = por %p177, %p178
      %p180 = scmp.ne.s32.totalorder %s169, %s172
      %p181 = scmp.eq.s32.totalorder %s21, 3
      %p182 = por %p180, %p181
      %p183 = scmp.ne.s32.totalorder %s172, %s173
      %p184 = scmp.eq.s32.totalorder %s21, 0
      %p185 = por %p183, %p184
      %p186 = scmp.ne.s32.totalorder %s172, %s173
      %p187 = scmp.eq.s32.totalorder %s22, 3
      %p188 = por %p186, %p187
      %p190 = scmp.ne.s32.totalorder %s173, %s189
      %p191 = scmp.eq.s32.totalorder %s22, 0
      %p192 = por %p190, %p191
      %p193 = scmp.le.s32.totalorder 1, %s16
      %p194 = scmp.lt.s32.totalorder %s16, 5
      %p195 = pnand %p193, %p194
      %p196 = pneg %p195
      // Predicated region
      $region9: #{tpu_custom_call.1} parent=5 // pred_check
        _
      $region10: #{tpu_custom_call.1} parent=5 // pred_check_branch
        %198 = sbr.rel (%p195) target = $region12
      $region11: #{tpu_custom_call.1} parent=5 // pred_region
        %s199 = ssub.s32 %s16, 1
        // Predicated region
        $region13: #{tpu_custom_call.1} parent=11 // pred_check
          %p200 = pneg %p75
        $region14: #{tpu_custom_call.1} parent=11 // pred_check_branch
          %202 = sbr.rel (%p200) target = $region16
        $region15: #{tpu_custom_call.1} parent=11 // pred_region
          _
        $region16: #{tpu_custom_call.1} parent=11 // pred_fallthru
          _
        // Predicated region
        $region17: #{tpu_custom_call.1} parent=11 // pred_check
          %p203 = pneg %p96
        $region18: #{tpu_custom_call.1} parent=11 // pred_check_branch
          %205 = sbr.rel (%p203) target = $region20
        $region19: #{tpu_custom_call.1} parent=11 // pred_region
          _
        $region20: #{tpu_custom_call.1} parent=11 // pred_fallthru
          _
        // Predicated region
        $region21: #{tpu_custom_call.1} parent=11 // pred_check
          %p206 = pneg %p117
        $region22: #{tpu_custom_call.1} parent=11 // pred_check_branch
          %208 = sbr.rel (%p206) target = $region24
        $region23: #{tpu_custom_call.1} parent=11 // pred_region
          _
        $region24: #{tpu_custom_call.1} parent=11 // pred_fallthru
          _
        // Predicated region
        $region25: #{tpu_custom_call.1} parent=11 // pred_check
          %p209 = pneg %p138
        $region26: #{tpu_custom_call.1} parent=11 // pred_check_branch
          %211 = sbr.rel (%p209) target = $region28
        $region27: #{tpu_custom_call.1} parent=11 // pred_region
          %s213 = ssub.s32 1024, 1024
          %214 = vsyncadd [#allocation5], %s213
          %s215 = sshll.u32 [#allocation4], 4
          %s216 = int_to_ptr.vmem [resolvable:$true] %s215
          %221 = dma.hbm_to_vmem [thread:$0]  %s4, 1024, %s216, [#allocation5], 64, 64, 4
        $region28: #{tpu_custom_call.1} parent=11 // pred_fallthru
          _
        // Predicated region
        $region29: #{tpu_custom_call.1} parent=11 // pred_check
          %p222 = pneg %p159
        $region30: #{tpu_custom_call.1} parent=11 // pred_check_branch
          %224 = sbr.rel (%p222) target = $region32
        $region31: #{tpu_custom_call.1} parent=11 // pred_region
          _
        $region32: #{tpu_custom_call.1} parent=11 // pred_fallthru
          _
      $region12: #{tpu_custom_call.1} parent=5 // pred_fallthru
        _
      %p225 = scmp.lt.s32.totalorder %s16, 4
      // Predicated region
      $region33: #{tpu_custom_call.1} parent=5 // pred_check
        %p226 = pneg %p225
      $region34: #{tpu_custom_call.1} parent=5 // pred_check_branch
        %228 = sbr.rel (%p226) target = $region36
      $region35: #{tpu_custom_call.1} parent=5 // pred_region
        // Predicated region
        $region37: #{tpu_custom_call.1} parent=35 // pred_check
          %p229 = pneg %p48
        $region38: #{tpu_custom_call.1} parent=35 // pred_check_branch
          %231 = sbr.rel (%p229) target = $region40
        $region39: #{tpu_custom_call.1} parent=35 // pred_region
          %s232 = smul.u32 2, %s24
          %p233 = scmp.lt.s32.totalorder %s232, 3
          %s234 = scalar_select %p233, %s232, 3
          %s235 = smul.addr %s234, 4
          %s236 = scalar_lea.vmem %s0, %s235
          %s237 = smul.u32 2, %s24
        $region40: #{tpu_custom_call.1} parent=35 // pred_fallthru
          _
      $region36: #{tpu_custom_call.1} parent=5 // pred_fallthru
        _
      %p238 = scmp.le.s32.totalorder 1, %s16
      %p239 = scmp.lt.s32.totalorder %s16, 5
      %p240 = pnand %p238, %p239
      %p241 = pneg %p240
      // Predicated region
      $region41: #{tpu_custom_call.1} parent=5 // pred_check
        _
      $region42: #{tpu_custom_call.1} parent=5 // pred_check_branch
        %243 = sbr.rel (%p240) target = $region44
      $region43: #{tpu_custom_call.1} parent=5 // pred_region
        %s244 = ssub.s32 %s16, 1
        // Predicated region
        $region45: #{tpu_custom_call.1} parent=43 // pred_check
          %p245 = pneg %p138
        $region46: #{tpu_custom_call.1} parent=43 // pred_check_branch
          %247 = sbr.rel (%p245) target = $region48
        $region47: #{tpu_custom_call.1} parent=43 // pred_region
          %248 = dma.done [#allocation5], 1024
        $region48: #{tpu_custom_call.1} parent=43 // pred_fallthru
          _
        %s249 = smul.u32 2, %s26
        %p250 = scmp.lt.s32.totalorder %s249, 3
        %s251 = scalar_select %p250, %s249, 3
        %s252 = smul.addr %s251, 4
        %s253 = scalar_lea.vmem %s0, %s252
        %p254 = pneg %p54
        %p255 = pneg %p51
        %p256 = pneg %p75
        %p257 = pneg %p72
        %p258 = pneg %p96
        %p259 = pneg %p93
        %p260 = pneg %p117
        %p261 = pneg %p114
        %p262 = pneg %p138
        %p263 = pneg %p135
        %p264 = pneg %p159
        %p265 = pneg %p156
        %p266 = pneg %p185
        %p267 = pneg %p182
        %s268 = sand.u32 %s172, 1
        %s269 = scalar_lea.sflag [#allocation6], %s268
        %s270 = sand.u32 %s172, 1
        %s271 = smul.addr %s270, 16
        %s272 = scalar_lea.vmem [#allocation7], %s271
        %s273 = smul.u32 2, %s26
        %p274 = scmp.lt.s32.totalorder %s273, 3
        %s275 = scalar_select %p274, %s273, 3
        %s276 = smul.addr %s275, 4
        %s277 = scalar_lea.vmem %s0, %s276
        %s278 = smul.u32 2, %s26
        %s279 = smul.u32 2, %s26
        %p281 = scmp.eq.s32.totalorder %s25, 0
        %p282 = scmp.eq.s32.totalorder %s26, 0
        %p283 = pnand %p281, %p282
        %p284 = pneg %p283
        // Predicated region
        $region49: #{tpu_custom_call.1} parent=43 // pred_check
          _
        $region50: #{tpu_custom_call.1} parent=43 // pred_check_branch
          %286 = sbr.rel (%p283) target = $region52
        $region51: #{tpu_custom_call.1} parent=43 // pred_region
          %v287 = vld [vmem:[%s1] sm:$0xf]
          %v288 = vld [vmem:[%s1 + $0x4] sm:$0xf]
          %v289 = vld [vmem:[%s1 + $0x8] sm:$0xf]
          %v290 = vld [vmem:[%s1 + $0xc] sm:$0xf]
          %v291 = vld [vmem:[%s2] sm:$0x3]
          %v296 = vunpack.c.l.b16 %v287
          %v297 = vunpack.c.l.b16 %v288
          %v298 = vunpack.c.l.b16 %v289
          %v299 = vunpack.c.l.b16 %v290
          %v300 = vpack.c.b16 %v297, %v296
          %v301 = vpack.c.b16 %v299, %v298
          %vm302 = vcmask 31744
          %v304 = vsel %vm302, %v300, 0
          %v307 = vsel %vm302, %v301, 0
          %vm309 = vcmask 1041408
          %v311 = vsel %vm309, %v291, 0
          %313 = vmatprep.subr.bf16.mxu0 0
          %314 = vmatpush1.bf16.msra.mxu0 %v311
          %315 = vmatprep.subr.bf16.mxu0 0
          %316 = vmatpush1.bf16.msra.mxu0 0
          %317 = vmatprep.subr.bf16.mxu0 0
          %318 = vmatpush1.bf16.msra.mxu0 0
          %319 = vmatprep.subr.bf16.mxu0 0
          %320 = vmatpush1.bf16.msra.mxu0 0
          %321 = vmatprep.subr.bf16.mxu0 0
          %322 = vmatpush1.bf16.msra.mxu0 0
          %323 = vmatprep.subr.bf16.mxu0 0
          %324 = vmatpush1.bf16.msra.mxu0 0
          %325 = vmatprep.subr.bf16.mxu0 0
          %326 = vmatpush1.bf16.msra.mxu0 0
          %327 = vmatprep.subr.bf16.mxu0 0
          %328 = vmatpush1.bf16.msra.mxu0 0
          %329 = vmatprep.subr.bf16.mxu0 0
          %330 = vmatpush1.bf16.msra.mxu0 0
          %331 = vmatprep.subr.bf16.mxu0 0
          %332 = vmatpush1.bf16.msra.mxu0 0
          %333 = vmatprep.subr.bf16.mxu0 0
          %334 = vmatpush1.bf16.msra.mxu0 0
          %335 = vmatprep.subr.bf16.mxu0 0
          %336 = vmatpush1.bf16.msra.mxu0 0
          %337 = vmatprep.subr.bf16.mxu0 0
          %338 = vmatpush1.bf16.msra.mxu0 0
          %339 = vmatprep.subr.bf16.mxu0 0
          %340 = vmatpush1.bf16.msra.mxu0 0
          %341 = vmatprep.subr.bf16.mxu0 0
          %342 = vmatpush1.bf16.msra.mxu0 0
          %343 = vmatprep.subr.bf16.mxu0 0
          %344 = vmatpush1.bf16.msra.mxu0 0
          %345 = vmatprep.mubr.bf16.mxu0 0
          %346 = vmatmul.mubr.bf16.gmra.mrb[0].mxu0 %v304
          %v347 = vpop.f32.mrb[0].mxu0
          %v348 = vadd.f32 0.0, %v347
          %v349 = vpop.f32.mrb[0].mxu0
          %v350 = vpop.f32.mrb[0].mxu0
          %v351 = vadd.f32 0.0, %v350
          %v352 = vpop.f32.mrb[0].mxu0
          %353 = vmatprep.mubr.bf16.mxu0 0
          %354 = vmatmul.mubr.bf16.gmra.mrb[0].mxu0 %v307
          %v355 = vpop.f32.mrb[0].mxu0
          %v356 = vadd.f32 0.0, %v355
          %v357 = vpop.f32.mrb[0].mxu0
          %v358 = vpop.f32.mrb[0].mxu0
          %v359 = vadd.f32 0.0, %v358
          %v360 = vpop.f32.mrb[0].mxu0
          %361 = vdwg.mxu0
          %v362 = vpack.c.bf16 %v351, %v348
          %v363 = vpack.c.bf16 %v359, %v356
          %364 = vst [vmem:[#allocation2] sm:$0xff] %v362
          %365 = vst [vmem:[#allocation2 + $0x8] sm:$0xff] %v363
        $region52: #{tpu_custom_call.1} parent=43 // pred_fallthru
          _
        %p366 = scmp.eq.s32.totalorder %s25, 1
        %p367 = pnand %p366, %p282
        %p368 = pneg %p367
        // Predicated region
        $region53: #{tpu_custom_call.1} parent=43 // pred_check
          _
        $region54: #{tpu_custom_call.1} parent=43 // pred_check_branch
          %370 = sbr.rel (%p367) target = $region56
        $region55: #{tpu_custom_call.1} parent=43 // pred_region
          %v371 = vld [vmem:[#allocation3] sm:$0xff]
          %v372 = vld [vmem:[#allocation3 + $0x8] sm:$0xff]
          %v373 = vld [vmem:[#allocation3 + $0x10] sm:$0xff]
          %v374 = vld [vmem:[#allocation3 + $0x18] sm:$0xff]
          %v375 = vpack.c.bf16 %v372, %v371
          %v376 = vpack.c.bf16 %v374, %v373
          %v377 = vld [vmem:[#allocation4] sm:$0xf]
          %v378 = vld [vmem:[#allocation4 + $0x4] sm:$0xf]
          %v379 = vld [vmem:[#allocation4 + $0x8] sm:$0xf]
          %v380 = vld [vmem:[#allocation4 + $0xc] sm:$0xf]
          %v381 = vld [vmem:[#allocation4 + $0x10] sm:$0xf]
          %v382 = vld [vmem:[#allocation4 + $0x14] sm:$0xf]
          %v383 = vld [vmem:[#allocation4 + $0x18] sm:$0xf]
          %v384 = vld [vmem:[#allocation4 + $0x1c] sm:$0xf]
          %v385 = vld [vmem:[#allocation4 + $0x20] sm:$0xf]
          %v386 = vld [vmem:[#allocation4 + $0x24] sm:$0xf]
          %v387 = vld [vmem:[#allocation4 + $0x28] sm:$0xf]
          %v388 = vld [vmem:[#allocation4 + $0x2c] sm:$0xf]
          %v389 = vld [vmem:[#allocation4 + $0x30] sm:$0xf]
          %v390 = vld [vmem:[#allocation4 + $0x34] sm:$0xf]
          %v391 = vld [vmem:[#allocation4 + $0x38] sm:$0xf]
          %v392 = vld [vmem:[#allocation4 + $0x3c] sm:$0xf]
          %v409 = vunpack.c.l.b16 %v377
          %v410 = vunpack.c.l.b16 %v378
          %v411 = vunpack.c.l.b16 %v379
          %v412 = vunpack.c.l.b16 %v380
          %v413 = vunpack.c.l.b16 %v381
          %v414 = vunpack.c.l.b16 %v382
          %v415 = vunpack.c.l.b16 %v383
          %v416 = vunpack.c.l.b16 %v384
          %v417 = vunpack.c.l.b16 %v385
          %v418 = vunpack.c.l.b16 %v386
          %v419 = vunpack.c.l.b16 %v387
          %v420 = vunpack.c.l.b16 %v388
          %v421 = vunpack.c.l.b16 %v389
          %v422 = vunpack.c.l.b16 %v390
          %v423 = vunpack.c.l.b16 %v391
          %v424 = vunpack.c.l.b16 %v392
          %v425 = vpack.c.b16 %v410, %v409
          %v426 = vpack.c.b16 %v412, %v411
          %v427 = vpack.c.b16 %v414, %v413
          %v428 = vpack.c.b16 %v416, %v415
          %v429 = vpack.c.b16 %v418, %v417
          %v430 = vpack.c.b16 %v420, %v419
          %v431 = vpack.c.b16 %v422, %v421
          %v432 = vpack.c.b16 %v424, %v423
          %441 = vmatprep.subr.bf16.mxu0 0
          %442 = vmatpush1.bf16.msra.mxu0 %v425
          %443 = vmatprep.subr.bf16.mxu0 0
          %444 = vmatpush1.bf16.msra.mxu0 %v426
          %445 = vmatprep.subr.bf16.mxu0 0
          %446 = vmatpush1.bf16.msra.mxu0 %v427
          %447 = vmatprep.subr.bf16.mxu0 0
          %448 = vmatpush1.bf16.msra.mxu0 %v428
          %449 = vmatprep.subr.bf16.mxu0 0
          %450 = vmatpush1.bf16.msra.mxu0 %v429
          %451 = vmatprep.subr.bf16.mxu0 0
          %452 = vmatpush1.bf16.msra.mxu0 %v430
          %453 = vmatprep.subr.bf16.mxu0 0
          %454 = vmatpush1.bf16.msra.mxu0 %v431
          %455 = vmatprep.subr.bf16.mxu0 0
          %456 = vmatpush1.bf16.msra.mxu0 %v432
          %457 = vmatprep.subr.bf16.mxu0 0
          %458 = vmatpush1.bf16.msra.mxu0 0
          %459 = vmatprep.subr.bf16.mxu0 0
          %460 = vmatpush1.bf16.msra.mxu0 0
          %461 = vmatprep.subr.bf16.mxu0 0
          %462 = vmatpush1.bf16.msra.mxu0 0
          %463 = vmatprep.subr.bf16.mxu0 0
          %464 = vmatpush1.bf16.msra.mxu0 0
          %465 = vmatprep.subr.bf16.mxu0 0
          %466 = vmatpush1.bf16.msra.mxu0 0
          %467 = vmatprep.subr.bf16.mxu0 0
          %468 = vmatpush1.bf16.msra.mxu0 0
          %469 = vmatprep.subr.bf16.mxu0 0
          %470 = vmatpush1.bf16.msra.mxu0 0
          %471 = vmatprep.subr.bf16.mxu0 0
          %472 = vmatpush1.bf16.msra.mxu0 0
          %473 = vmatprep.mubr.bf16.mxu0 0
          %474 = vmatmul.mubr.bf16.gmra.mrb[0].mxu0 %v375
          %v475 = vpop.f32.mrb[0].mxu0
          %v476 = vadd.f32 0.0, %v475
          %v477 = vpop.f32.mrb[0].mxu0
          %v478 = vpop.f32.mrb[0].mxu0
          %v479 = vadd.f32 0.0, %v478
          %v480 = vpop.f32.mrb[0].mxu0
          %481 = vmatprep.mubr.bf16.mxu0 0
          %482 = vmatmul.mubr.bf16.gmra.mrb[0].mxu0 %v376
          %v483 = vpop.f32.mrb[0].mxu0
          %v484 = vadd.f32 0.0, %v483
          %v485 = vpop.f32.mrb[0].mxu0
          %v486 = vpop.f32.mrb[0].mxu0
          %v487 = vadd.f32 0.0, %v486
          %v488 = vpop.f32.mrb[0].mxu0
          %489 = vdwg.mxu0
          %v490 = vpack.c.bf16 %v479, %v476
          %v491 = vpack.c.bf16 %v487, %v484
          %492 = vst [vmem:[#allocation2] sm:$0xff] %v490
          %493 = vst [vmem:[#allocation2 + $0x8] sm:$0xff] %v491
        $region56: #{tpu_custom_call.1} parent=43 // pred_fallthru
          _
        %v494 = vld [vmem:[%s277] sm:$0xf]
        %v495 = vld [vmem:[%s277 + $0x4] sm:$0xf]
        %v496 = vld [vmem:[#allocation2] sm:$0xff]
        %v497 = vld [vmem:[#allocation2 + $0x8] sm:$0xff]
        %v500 = vunpack.c.l.b16 %v494
        %v501 = vunpack.c.l.b16 %v495
        %v502 = vpack.c.b16 %v501, %v500
        %vm503 = vcmask 261120
        %v505 = vsel %vm503, %v502, 0
        %507 = vmatprep.subr.bf16.mxu0 0
        %508 = vmatpush1.bf16.msra.mxu0 %v496
        %509 = vmatprep.subr.bf16.mxu0 0
        %510 = vmatpush1.bf16.msra.mxu0 %v497
        %511 = vmatprep.subr.bf16.mxu0 0
        %512 = vmatpush1.bf16.msra.mxu0 0
        %513 = vmatprep.subr.bf16.mxu0 0
        %514 = vmatpush1.bf16.msra.mxu0 0
        %515 = vmatprep.subr.bf16.mxu0 0
        %516 = vmatpush1.bf16.msra.mxu0 0
        %517 = vmatprep.subr.bf16.mxu0 0
        %518 = vmatpush1.bf16.msra.mxu0 0
        %519 = vmatprep.subr.bf16.mxu0 0
        %520 = vmatpush1.bf16.msra.mxu0 0
        %521 = vmatprep.subr.bf16.mxu0 0
        %522 = vmatpush1.bf16.msra.mxu0 0
        %523 = vmatprep.subr.bf16.mxu0 0
        %524 = vmatpush1.bf16.msra.mxu0 0
        %525 = vmatprep.subr.bf16.mxu0 0
        %526 = vmatpush1.bf16.msra.mxu0 0
        %527 = vmatprep.subr.bf16.mxu0 0
        %528 = vmatpush1.bf16.msra.mxu0 0
        %529 = vmatprep.subr.bf16.mxu0 0
        %530 = vmatpush1.bf16.msra.mxu0 0
        %531 = vmatprep.subr.bf16.mxu0 0
        %532 = vmatpush1.bf16.msra.mxu0 0
        %533 = vmatprep.subr.bf16.mxu0 0
        %534 = vmatpush1.bf16.msra.mxu0 0
        %535 = vmatprep.subr.bf16.mxu0 0
        %536 = vmatpush1.bf16.msra.mxu0 0
        %537 = vmatprep.subr.bf16.mxu0 0
        %538 = vmatpush1.bf16.msra.mxu0 0
        %539 = vmatprep.mubr.bf16.mxu0 0
        %540 = vmatmul.mubr.bf16.gmra.mrb[0].mxu0 %v505
        %v541 = vpop.f32.mrb[0].mxu0
        %v542 = vadd.f32 0.0, %v541
        %v543 = vpop.f32.mrb[0].mxu0
        %v544 = vpop.f32.mrb[0].mxu0
        %v545 = vadd.f32 0.0, %v544
        %v546 = vpop.f32.mrb[0].mxu0
        %547 = vdwg.mxu0
        // Predicated region
        $region57: #{tpu_custom_call.1} parent=43 // pred_check
          %p548 = pneg %p281
        $region58: #{tpu_custom_call.1} parent=43 // pred_check_branch
          %550 = sbr.rel (%p548) target = $region60
        $region59: #{tpu_custom_call.1} parent=43 // pred_region
          %v551 = vld [vmem:[%s3] sm:$0x1]
          %v553 = vlaneseq
          %v554 = vshrl.u32 %v553, 7
          %v555 = vsub.s32 0, %v554
          %v556 = vrot.slane %v551, %v555
          %v558 = vadd.f32 %v542, %v556
          %v559 = vadd.f32 %v545, %v556
          %v560 = vmax.f32 %v558, 0.0
          %v561 = vmax.f32 %v559, 0.0
          %s562 = smul.u32 %s26, 16
          %s563 = scalar_lea.vmem [#allocation3], %s562
          %564 = vst [vmem:[%s563] sm:$0xff] %v560
          %565 = vst [vmem:[%s563 + $0x8] sm:$0xff] %v561
          %566 = vst [vmem:[%s272] sm:$0xff] %v560
          %567 = vst [vmem:[%s272 + $0x8] sm:$0xff] %v561
        $region60: #{tpu_custom_call.1} parent=43 // pred_fallthru
          _
        // Predicated region
        $region61: #{tpu_custom_call.1} parent=43 // pred_check
          %p568 = pneg %p366
        $region62: #{tpu_custom_call.1} parent=43 // pred_check_branch
          %570 = sbr.rel (%p568) target = $region64
        $region63: #{tpu_custom_call.1} parent=43 // pred_region
          %v571 = vld [vmem:[%s5] sm:$0x1]
          %v573 = vlaneseq
          %v574 = vshrl.u32 %v573, 7
          %v575 = vsub.s32 0, %v574
          %v576 = vrot.slane %v571, %v575
          %v578 = vadd.f32 %v542, %v576
          %v579 = vadd.f32 %v545, %v576
          %580 = vst [vmem:[%s272] sm:$0xff] %v578
          %581 = vst [vmem:[%s272 + $0x8] sm:$0xff] %v579
        $region64: #{tpu_custom_call.1} parent=43 // pred_fallthru
          _
        %s582 = sand.u32 %s172, 1
        %s583 = scalar_lea.sflag [#allocation6], %s582
        %s584 = sand.u32 %s172, 1
        %s585 = smul.addr %s584, 16
        %s586 = scalar_lea.vmem [#allocation7], %s585
        // Predicated region
        $region65: #{tpu_custom_call.1} parent=43 // pred_check
          %p587 = pneg %p182
        $region66: #{tpu_custom_call.1} parent=43 // pred_check_branch
          %589 = sbr.rel (%p587) target = $region68
        $region67: #{tpu_custom_call.1} parent=43 // pred_region
          %s590 = smul.u32 2, %s26
          %s592 = ssub.s32 256, 256
          %593 = vsyncadd %s583, %s592
          %s594 = smul.addr %s590, 128
          %s595 = scalar_lea.hbm %s6, %s594
          %s596 = sshll.u32 %s586, 4
          %s597 = int_to_ptr.vmem [resolvable:$true] %s596
          %602 = dma.vmem_to_hbm [thread:$0]  %s597, 256, %s595, %s583, 128, 128, 8
        $region68: #{tpu_custom_call.1} parent=43 // pred_fallthru
          _
      $region44: #{tpu_custom_call.1} parent=5 // pred_fallthru
        _
      %p603 = scmp.le.s32.totalorder 2, %s16
      // Predicated region
      $region69: #{tpu_custom_call.1} parent=5 // pred_check
        %p604 = pneg %p603
      $region70: #{tpu_custom_call.1} parent=5 // pred_check_branch
        %606 = sbr.rel (%p604) target = $region72
      $region71: #{tpu_custom_call.1} parent=5 // pred_region
        %s607 = ssub.s32 %s16, 2
        // Predicated region
        $region73: #{tpu_custom_call.1} parent=71 // pred_check
          %p608 = pneg %p188
        $region74: #{tpu_custom_call.1} parent=71 // pred_check_branch
          %610 = sbr.rel (%p608) target = $region76
        $region75: #{tpu_custom_call.1} parent=71 // pred_region
          %s611 = sand.u32 %s173, 1
          %s612 = scalar_lea.sflag [#allocation6], %s611
          %s613 = sand.u32 %s173, 1
          %s614 = smul.addr %s613, 16
          %s615 = scalar_lea.vmem [#allocation7], %s614
          %616 = dma.done %s612, 256
        $region76: #{tpu_custom_call.1} parent=71 // pred_fallthru
          _
      $region72: #{tpu_custom_call.1} parent=5 // pred_fallthru
        _
    $region6: #{tpu_custom_call.1} parent=1 // loop_footer
      %s20 = sadd.s32 1, %s16
    $region7: #{tpu_custom_call.1} parent=1 // loop_footer_branch
      %15 = sbr.rel target = $region3
    $region8: #{tpu_custom_call.1} parent=1 // loop_exit
      _
    %617 = vsyncpa [#allocation5], 1
    %s618 = scalar_lea.sflag [#allocation5], 1
    %619 = vsyncpa %s618, 1
    %620 = vsyncpa [#allocation6], 1
    %s621 = scalar_lea.sflag [#allocation6], 1
    %622 = vsyncpa %s621, 1

</llo_original>
